<compile_context>
chip_gen: v7x
topology: tpu7x:2x2x1
jax: 0.10.0
libtpu: 0.0.40
codegen_flags: <defaults>
</compile_context>

<pallas_src>
import functools

import jax
import jax.numpy as jnp
from jax.experimental import pallas as pl
from jax.experimental.pallas import tpu as pltpu

EPSILON = 1e-10


def _cmp_loss_kernel(probs_ref, lab_col_ref, lab_row_ref, out_ref, *,
                     batch_size, block_rows, count_check):
    step = pl.program_id(0)

    probs = probs_ref[...].astype(jnp.float32)   # (TB, C) upcast in-kernel
    lab_col = lab_col_ref[...]                   # (TB, 1) i32 -> labels[i] per row
    lab_row = lab_row_ref[...]                   # (1,  C) i32 -> labels[j] per column
    tb, c = probs.shape

    # p_xi_yi = probs[i, labels[i]] via one-hot masked row-sum.
    # (1, C) iota broadcast against the (TB, 1) label column (no full-tile iota).
    col_idx = jax.lax.broadcasted_iota(jnp.int32, (1, c), dimension=1)
    diag = jnp.sum(jnp.where(col_idx == lab_col, probs, 0.0),
                   axis=-1, keepdims=True)                       # (TB, 1)

    # selected[i, j] = probs[i, j] if (labels[j] != labels[i]) and
    #                  (probs[i, j] > p_xi_yi) else 0   (fused nested select).
    selected = jnp.where(lab_row != lab_col,
                         jnp.where(probs > diag, probs, 0.0),
                         0.0)                                    # (TB, C)
    s = jnp.sum(selected, axis=-1, keepdims=True)                # (TB, 1)

    # Remainder-tile handling: rows past the true batch size contribute 0.
    row_idx = step * block_rows + jax.lax.broadcasted_iota(jnp.int32, (tb, 1), 0)
    valid = row_idx < batch_size                                 # (TB, 1) bool

    if count_check:
        # Exact PyTorch check (needed only if probs may contain negatives).
        cnt = jnp.sum(jnp.where(lab_row != lab_col,
                                jnp.where(probs > diag, 1.0, 0.0),
                                0.0), axis=-1, keepdims=True)
        nonempty = cnt > 0.0
    else:
        # probs >= 0  =>  (s > 0) <=> the selected set is non-empty.
        nonempty = s > 0.0

    contrib = jnp.where(valid & nonempty,
                        diag * pl.reciprocal(s + EPSILON, approx=True),
                        0.0)                                     # (TB, 1)

    # Per-tile partial sum; division by batch_size happens once in the wrapper.
    out_ref[...] = jnp.sum(contrib).reshape(1, 1)


def _pick_block_rows(B, C, itemsize, requested=None):
    """Batch-tile size: byte-budgeted (~4 MiB of probs per pipeline buffer)."""
    mult = max(8, 32 // itemsize)          # 8 for f32, 16 for bf16/f16, 32 for 8-bit
    if requested is not None:
        tb = min(requested, B)
    else:
        budget = 4 << 20                   # ~4 MiB per buffer; 2x fits default scoped VMEM
        tb = max(1, budget // (C * itemsize))
        tb = min(tb, 4096, B)
    if tb >= B:
        return B                           # block == full array dim (always legal)
    # TODO(synk): for very large C the `mult`-row floor can exceed the VMEM
    # budget; a lane (column) tiling axis would be needed there.
    return max(mult, (tb // mult) * mult)  # sublane dim must be a multiple of `mult`


def cmp_loss(probs, labels, *, block_rows=None, count_check=False):
    """probs: (B, C) float (B == C), labels: (B,) int. Returns scalar f32 loss.

    probs is streamed in its native dtype (bf16 supported); the kernel upcasts
    to f32 internally.  Assumes probs >= 0 unless count_check=True.
    """
    B, C = probs.shape
    assert B == C, "original PyTorch indexing requires batch_size == num_classes"

    if (not jnp.issubdtype(probs.dtype, jnp.floating)
            or jnp.dtype(probs.dtype).itemsize > 4):
        probs = probs.astype(jnp.float32)
    itemsize = jnp.dtype(probs.dtype).itemsize

    lab_col = labels.astype(jnp.int32).reshape(B, 1)   # labels[i] per row
    lab_row = labels.astype(jnp.int32).reshape(1, C)   # labels[j] per column

    tb = _pick_block_rows(B, C, itemsize, block_rows)
    num_tiles = pl.cdiv(B, tb)

    grid_spec = pltpu.PrefetchScalarGridSpec(
        num_scalar_prefetch=0,
        grid=(num_tiles,),
        in_specs=[
            pl.BlockSpec((tb, C), lambda i: (i, 0)),   # probs row tile (native dtype)
            pl.BlockSpec((tb, 1), lambda i: (i, 0)),   # labels[i] column
            pl.BlockSpec((1, C), lambda i: (0, 0)),    # labels[j] row (resident)
        ],
        out_specs=pl.BlockSpec((1, 1), lambda i: (i, 0)),  # per-tile partial sum
    )

    partials = pl.pallas_call(
        functools.partial(_cmp_loss_kernel, batch_size=B, block_rows=tb,
                          count_check=count_check),
        out_shape=jax.ShapeDtypeStruct((num_tiles, 1), jnp.float32),
        grid_spec=grid_spec,
        compiler_params=pltpu.CompilerParams(
            dimension_semantics=("parallel",),   # independent tiles -> megacore on v7x
        ),
    )(probs, lab_col, lab_row)

    return jnp.sum(partials) / jnp.float32(B)


def _cmp_loss_ref(probs, labels, eps=EPSILON):
    """Pure-numpy mirror of the PyTorch loop (for validation)."""
    import numpy as np
    probs = np.asarray(probs, dtype=np.float32)
    labels = np.asarray(labels)
    B, C = probs.shape
    loss = 0.0
    for i in range(B):
        p_ii = probs[i, labels[i]]
        p_ij = probs[i, labels != labels[i]]
        p_ij = p_ij[p_ij > p_ii]
        if len(p_ij) > 0:
            loss += p_ii / (p_ij.sum() + eps)
    return loss / B


if __name__ == "__main__":
    import numpy as np

    key = jax.random.PRNGKey(0)
    k1, k2, k3, k4, k5, k6 = jax.random.split(key, 6)

    def _check(loss, ref, rel=2e-3):
        # rel tolerance accounts for the approx (EUP) reciprocal.
        assert abs(float(loss) - float(ref)) < rel * max(1.0, abs(float(ref))), (
            float(loss), float(ref))

    # Case 1: tiny, single tile (B == C == 8, as the original indexing requires).
    B1 = 8
    probs1 = jax.nn.softmax(jax.random.normal(k1, (B1, B1), dtype=jnp.float32), axis=-1)
    labels1 = jax.random.randint(k2, (B1,), 0, B1, dtype=jnp.int32)
    loss1 = cmp_loss(probs1, labels1)
    jax.block_until_ready(loss1)
    _check(loss1, _cmp_loss_ref(np.asarray(probs1), np.asarray(labels1)))

    # Case 2: batch-tiled grid + remainder-tile masking + per-tile partials
    # (B == C == 40 with 16-row tiles -> grid of 3, last tile half padding).
    B2 = 40
    probs2 = jax.nn.softmax(jax.random.normal(k3, (B2, B2), dtype=jnp.float32), axis=-1)
    labels2 = jax.random.randint(k4, (B2,), 0, B2, dtype=jnp.int32)
    loss2 = cmp_loss(probs2, labels2, block_rows=16)
    jax.block_until_ready(loss2)
    _check(loss2, _cmp_loss_ref(np.asarray(probs2), np.asarray(labels2)))

    # Case 3: native bf16 streaming (upcast happens inside the kernel).
    B3 = 32
    probs3 = jax.nn.softmax(jax.random.normal(k5, (B3, B3), dtype=jnp.float32),
                            axis=-1).astype(jnp.bfloat16)
    labels3 = jax.random.randint(k6, (B3,), 0, B3, dtype=jnp.int32)
    loss3 = cmp_loss(probs3, labels3)
    jax.block_until_ready(loss3)
    _check(loss3, _cmp_loss_ref(np.asarray(probs3, dtype=np.float32),
                                np.asarray(labels3)))

    print("KERNEL_OK")
</pallas_src>

<mosaic_0001>
module attributes {stable_mosaic.version = 11 : i64} {
  func.func @_cmp_loss_kernel(%arg0: i32, %arg1: memref<8x8xf32, #tpu.memory_space<vmem>>, %arg2: memref<8x1xi32, #tpu.memory_space<vmem>>, %arg3: memref<1x8xi32, #tpu.memory_space<vmem>>, %arg4: memref<1x1xf32, #tpu.memory_space<vmem>>) attributes {dimension_semantics = [#tpu.dimension_semantics<parallel>], iteration_bounds = array<i64: 1>, scalar_prefetch = 0 : i64, scratch_operands = 0 : i64, tpu.core_type = #tpu.core_type<tc>, window_params = [{transform_indices = @transform_0, window_bounds = array<i64: 8, 8>}, {transform_indices = @transform_1, window_bounds = array<i64: 8, 1>}, {pipeline_mode = #tpu.pipeline_mode<synchronous>, transform_indices = @transform_2, window_bounds = array<i64: 1, 8>}, {transform_indices = @transform_3, window_bounds = array<i64: 1, 1>}]} {
    %c0 = arith.constant 0 : index
    %c0_0 = arith.constant 0 : index
    %0 = vector.load %arg1[%c0, %c0_0] : memref<8x8xf32, #tpu.memory_space<vmem>>, vector<8x8xf32>
    %c0_1 = arith.constant 0 : index
    %c0_2 = arith.constant 0 : index
    %1 = vector.load %arg2[%c0_1, %c0_2] : memref<8x1xi32, #tpu.memory_space<vmem>>, vector<8x1xi32>
    %c0_3 = arith.constant 0 : index
    %c0_4 = arith.constant 0 : index
    %2 = vector.load %arg3[%c0_3, %c0_4] : memref<1x8xi32, #tpu.memory_space<vmem>>, vector<1x8xi32>
    %3 = tpu.iota {dimensions = array<i32: 1>} : vector<1x8xi32>
    %4 = vector.broadcast %3 : vector<1x8xi32> to vector<8x8xi32>
    %5 = vector.broadcast %1 : vector<8x1xi32> to vector<8x8xi32>
    %6 = arith.cmpi eq, %4, %5 : vector<8x8xi32>
    %cst = arith.constant 0.000000e+00 : f32
    %7 = vector.broadcast %cst : f32 to vector<8x8xf32>
    %8 = arith.select %6, %0, %7 : vector<8x8xi1>, vector<8x8xf32>
    %cst_5 = arith.constant dense<0.000000e+00> : vector<8xf32>
    %9 = vector.multi_reduction <add>, %8, %cst_5 [1] : vector<8x8xf32> to vector<8xf32>
    %10 = vector.shape_cast %9 : vector<8xf32> to vector<8x1xf32>
    %11 = vector.broadcast %2 : vector<1x8xi32> to vector<8x8xi32>
    %12 = vector.broadcast %1 : vector<8x1xi32> to vector<8x8xi32>
    %13 = arith.cmpi ne, %11, %12 : vector<8x8xi32>
    %14 = vector.broadcast %10 : vector<8x1xf32> to vector<8x8xf32>
    %15 = arith.cmpf ogt, %0, %14 : vector<8x8xf32>
    %cst_6 = arith.constant 0.000000e+00 : f32
    %16 = vector.broadcast %cst_6 : f32 to vector<8x8xf32>
    %17 = arith.select %15, %0, %16 : vector<8x8xi1>, vector<8x8xf32>
    %cst_7 = arith.constant 0.000000e+00 : f32
    %18 = vector.broadcast %cst_7 : f32 to vector<8x8xf32>
    %19 = arith.select %13, %17, %18 : vector<8x8xi1>, vector<8x8xf32>
    %cst_8 = arith.constant dense<0.000000e+00> : vector<8xf32>
    %20 = vector.multi_reduction <add>, %19, %cst_8 [1] : vector<8x8xf32> to vector<8xf32>
    %21 = vector.shape_cast %20 : vector<8xf32> to vector<8x1xf32>
    %c8_i32 = arith.constant 8 : i32
    %22 = arith.muli %arg0, %c8_i32 : i32
    %23 = tpu.iota {dimensions = array<i32: 0>} : vector<8x1xi32>
    %24 = vector.broadcast %22 : i32 to vector<8x1xi32>
    %25 = arith.addi %24, %23 : vector<8x1xi32>
    %c8_i32_9 = arith.constant 8 : i32
    %26 = vector.broadcast %c8_i32_9 : i32 to vector<8x1xi32>
    %27 = arith.cmpi slt, %25, %26 : vector<8x1xi32>
    %cst_10 = arith.constant 0.000000e+00 : f32
    %28 = vector.broadcast %cst_10 : f32 to vector<8x1xf32>
    %29 = arith.cmpf ogt, %21, %28 : vector<8x1xf32>
    %30 = arith.andi %27, %29 : vector<8x1xi1>
    %cst_11 = arith.constant 1.000000e-10 : f32
    %31 = vector.broadcast %cst_11 : f32 to vector<8x1xf32>
    %32 = arith.addf %21, %31 : vector<8x1xf32>
    %33 = tpu.reciprocal %32 {approx = true} : vector<8x1xf32> -> vector<8x1xf32>
    %34 = arith.mulf %10, %33 : vector<8x1xf32>
    %cst_12 = arith.constant 0.000000e+00 : f32
    %35 = vector.broadcast %cst_12 : f32 to vector<8x1xf32>
    %36 = arith.select %30, %34, %35 : vector<8x1xi1>, vector<8x1xf32>
    %37 = vector.shape_cast %36 : vector<8x1xf32> to vector<1x8x1xf32>
    %cst_13 = arith.constant dense<0.000000e+00> : vector<1xf32>
    %38 = vector.multi_reduction <add>, %37, %cst_13 [1, 2] : vector<1x8x1xf32> to vector<1xf32>
    %39 = vector.shape_cast %38 : vector<1xf32> to vector<1x1x1xf32>
    %40 = vector.extract %39[0, 0, 0] : f32 from vector<1x1x1xf32>
    %41 = vector.broadcast %40 : f32 to vector<1x1xf32>
    %c0_14 = arith.constant 0 : index
    %c0_15 = arith.constant 0 : index
    %42 = vector.load %arg4[%c0_14, %c0_15] : memref<1x1xf32, #tpu.memory_space<vmem>>, vector<1x1xf32>
    tpu.vector_store %arg4[%c0_14, %c0_15], %41 {strides = array<i32>} : memref<1x1xf32, #tpu.memory_space<vmem>>, vector<1x1xf32>,
    return
  }
  func.func @transform_0(%arg0: i32) -> (i32, i32) {
    %c0_i32 = arith.constant 0 : i32
    %c0_i32_0 = arith.constant 0 : i32
    return %arg0, %c0_i32 : i32, i32
  }
  func.func @transform_1(%arg0: i32) -> (i32, i32) {
    %c0_i32 = arith.constant 0 : i32
    %c0_i32_0 = arith.constant 0 : i32
    return %arg0, %c0_i32 : i32, i32
  }
  func.func @transform_2(%arg0: i32) -> (i32, i32) {
    %c0_i32 = arith.constant 0 : i32
    %c0_i32_0 = arith.constant 0 : i32
    %c0_i32_1 = arith.constant 0 : i32
    return %c0_i32, %c0_i32_0 : i32, i32
  }
  func.func @transform_3(%arg0: i32) -> (i32, i32) {
    %c0_i32 = arith.constant 0 : i32
    %c0_i32_0 = arith.constant 0 : i32
    return %arg0, %c0_i32 : i32, i32
  }
}

</mosaic_0001>

<llo_original>
// kernel: tpu_custom_call.1
$region0: #{tpu_custom_call.1}
  #allocation0 [shape = 'u32[]', space=smem, size = 0x4, offset = 0x4, fixed_abs, tag = 'smem constant byte address 0x4 - core index']
  #allocation1 [shape = 'u32[144,128]{1,0:T(1,128)}', space=vmem, size = 0x12000, scoped, tag = 'internal scratch']
  %s0 = inlined_call_operand.vmem [shape: f32[8,8], index: 0, kind: input, shape index: {}]
  %s1 = inlined_call_operand.vmem [shape: s32[8,1], index: 1, kind: input, shape index: {}]
  %s2 = inlined_call_operand.vmem [shape: s32[1,8], index: 2, kind: input, shape index: {}]
  %s3 = inlined_call_operand.hbm [shape: f32[1,1], index: 3, kind: output, shape index: {}]
  %s4 = sld [smem:[#allocation0]]
  $region22: #{tpu_custom_call.1} parent=0
    _
  %s6 = ssub.s32 1, %s4
  %s7 = scalar_select 0, %s6, %s4
  $region1: #{tpu_custom_call.1} parent=0
    #allocation2 [shape = 'u8[512]{0}', space=vmem, size = 0x400, scoped, tag = 'output window, operand 0, single buffered']
    #allocation3 [shape = 's32[1]{0}', space=sflag, size = 0x4, scoped, tag = 'scoped memory for tpu_custom_call.1']
    %8 = vsyncpa [#allocation3], 0
    // Predicated region
    $region2: #{tpu_custom_call.1} parent=1 // pred_check
      _
    $region3: #{tpu_custom_call.1} parent=1 // pred_check_branch
      %10 = sbr.rel (0) target = $region5
    $region4: #{tpu_custom_call.1} parent=1 // pred_region
      _
    $region5: #{tpu_custom_call.1} parent=1 // pred_fallthru
      _
    // Predicated region
    $region6: #{tpu_custom_call.1} parent=1 // pred_check
      _
    $region7: #{tpu_custom_call.1} parent=1 // pred_check_branch
      %12 = sbr.rel (0) target = $region9
    $region8: #{tpu_custom_call.1} parent=1 // pred_region
      _
    $region9: #{tpu_custom_call.1} parent=1 // pred_fallthru
      _
    // Predicated region
    $region10: #{tpu_custom_call.1} parent=1 // pred_check
      _
    $region11: #{tpu_custom_call.1} parent=1 // pred_check_branch
      %14 = sbr.rel (0) target = $region13
    $region12: #{tpu_custom_call.1} parent=1 // pred_region
      _
    $region13: #{tpu_custom_call.1} parent=1 // pred_fallthru
      _
    %v15 = vld [vmem:[%s0] sm:$0xff]
    %v16 = vld [vmem:[%s1] sm:$0xff]
    %v17 = vld [vmem:[%s2] sm:$0x1]
    %v18 = vlaneseq
    %v19 = vand.u32 %v18, 127
    %20 = vset.pattern.permute.xlu0 0
    %21 = vperm.xlu0 %20, %v16
    %v22 = vpop.permute.xlu0 %21
    %vm23 = vcmp.eq.s32.totalorder %v19, %v22
    %v24 = vsel %vm23, %v15, 0.0
    %vm25 = vcmask 64512
    %v26 = vsel %vm25, %v24, 0.0
    %27 = vadd.xlane.f32.xlu0 %v26
    %v28 = vpop.xlane.xlu0 %27
    %v29 = vlaneseq
    %v30 = vshrl.u32 %v29, 7
    %v31 = vsub.s32 0, %v30
    %v32 = vrot.slane %v17, %v31
    %vm33 = vcmp.ne.s32.totalorder %v32, %v22
    %vm34 = vcmp.gt.f32.partialorder %v15, %v28
    %v35 = vsel %vm34, %v15, 0.0
    %v36 = vsel %vm33, %v35, 0.0
    %v37 = vsel %vm25, %v36, 0.0
    %38 = vadd.xlane.f32.xlu0 %v37
    %v39 = vpop.xlane.xlu0 %38
    %s40 = smul.u32 0, 8
    %v41 = vlaneseq
    %v42 = vshrl.u32 %v41, 7
    %v43 = vstv %s40
    %v44 = vadd.s32 %v43, %v42
    %vm45 = vcmp.lt.s32.totalorder %v44, 8
    %vm46 = vcmp.gt.f32.partialorder %v39, 0.0
    %vm47 = vmand %vm45, %vm46
    %v48 = vadd.f32 %v39, 1e-10
    %v49 = vrcp.pop %v48
    %v50 = vmul.f32 %v28, %v49
    %v51 = vsel %vm47, %v50, 0.0
    %vm52 = vcmask 7168
    %v53 = vsel %vm52, %v51, 0.0
    %54 = vadd.xlane.f32.xlu0 %v53
    %v55 = vpop.xlane.xlu0 %54
    %v56 = vrot.slane %v55, 4
    %v57 = vadd.f32 %v55, %v56
    %v58 = vrot.slane %v57, 2
    %v59 = vadd.f32 %v57, %v58
    %v60 = vrot.slane %v59, 1
    %v61 = vadd.f32 %v59, %v60
    %s62 = vtos %v61
    %v63 = vstv %s62
    %vm64 = vcmask 0
    %65 = vst.msk [vmem:[#allocation2] sm:$0x1] %vm64, %v63
    // Predicated region
    $region14: #{tpu_custom_call.1} parent=1 // pred_check
      _
    $region15: #{tpu_custom_call.1} parent=1 // pred_check_branch
      %67 = sbr.rel (0) target = $region17
    $region16: #{tpu_custom_call.1} parent=1 // pred_region
      %s69 = ssub.s32 16, 16
      %70 = vsyncadd [#allocation3], %s69
      %s72 = sshll.u32 [#allocation2], 4
      %s73 = int_to_ptr.vmem [resolvable:$true] %s72
      %75 = dma.vmem_to_hbm [thread:$0]  %s73, 16, %s3, [#allocation3]
    $region17: #{tpu_custom_call.1} parent=1 // pred_fallthru
      _
    // Predicated region
    $region18: #{tpu_custom_call.1} parent=1 // pred_check
      _
    $region19: #{tpu_custom_call.1} parent=1 // pred_check_branch
      %77 = sbr.rel (0) target = $region21
    $region20: #{tpu_custom_call.1} parent=1 // pred_region
      %78 = dma.done [#allocation3], 16
    $region21: #{tpu_custom_call.1} parent=1 // pred_fallthru
      _
    %79 = vsyncpa [#allocation3], 1

</llo_original>
